<compile_context>
chip_gen: v6e
topology: v6e:2x2x1
jax: 0.10.0
libtpu: 0.0.40
codegen_flags: <defaults>
</compile_context>

<pallas_src>
import functools

import jax
import jax.numpy as jnp
from jax import lax
from jax.experimental import pallas as pl
from jax.experimental.pallas import tpu as pltpu

INPUT_SIZE = 10
NUM_CLASSES = 2
DEFAULT_TILE_B = 2048  # rows per grid step; padded VMEM cost ~1 MiB/buffer -> fits all gens


def _round_up(n, m):
    return ((n + m - 1) // m) * m


def linear_kernel(x_ref, w_ref, b_ref, o_ref):
    # x_ref: (TB, INPUT_SIZE), w_ref: (NUM_CLASSES, INPUT_SIZE), b_ref: (1, NUM_CLASSES)
    x = x_ref[...]
    w = w_ref[...]
    b = b_ref[...]
    # Contract last axis of x with last axis of w -> (TB, NUM_CLASSES); no transpose needed.
    y = lax.dot_general(
        x, w,
        dimension_numbers=(((1,), (1,)), ((), ())),
        preferred_element_type=jnp.float32,
    )
    o_ref[...] = (y + b).astype(o_ref.dtype)


@functools.partial(jax.jit, static_argnames=("tile_b",))
def logistic_regression_forward(x, weight, bias, tile_b=DEFAULT_TILE_B):
    """y_hat = x @ weight.T + bias  (matches torch nn.Linear forward)."""
    B = x.shape[0]
    # Batch tile: multiple of 8 (sublane constraint), capped at tile_b.
    tb = min(tile_b, _round_up(B, 8))
    b_pad = _round_up(B, tb)
    if b_pad != B:
        x = jnp.pad(x, ((0, b_pad - B), (0, 0)))
    bias2d = bias.reshape(1, NUM_CLASSES)

    grid = (b_pad // tb,)
    flops = 2 * b_pad * INPUT_SIZE * NUM_CLASSES
    bytes_accessed = 4 * (
        b_pad * INPUT_SIZE            # x
        + NUM_CLASSES * INPUT_SIZE    # W
        + NUM_CLASSES                 # b
        + b_pad * NUM_CLASSES         # out
    )

    out = pl.pallas_call(
        linear_kernel,
        out_shape=jax.ShapeDtypeStruct((b_pad, NUM_CLASSES), jnp.float32),
        grid_spec=pltpu.PrefetchScalarGridSpec(
            num_scalar_prefetch=0,
            grid=grid,
            in_specs=[
                # x: tiled over the batch (pipelined / double-buffered).
                pl.BlockSpec((tb, INPUT_SIZE), lambda i: (i, 0)),
                # weight / bias: tiny, resident across all grid steps.
                pl.BlockSpec((NUM_CLASSES, INPUT_SIZE), lambda i: (0, 0)),
                pl.BlockSpec((1, NUM_CLASSES), lambda i: (0, 0)),
            ],
            out_specs=pl.BlockSpec((tb, NUM_CLASSES), lambda i: (i, 0)),
        ),
        compiler_params=pltpu.CompilerParams(
            dimension_semantics=("parallel",),       # shards batch tiles across TCs on v7x
            vmem_limit_bytes=32 * 1024 * 1024,       # safe on v5e/v6e/v7x; tiles are ~1 MiB
        ),
        cost_estimate=pl.CostEstimate(
            flops=flops, transcendentals=0, bytes_accessed=bytes_accessed
        ),
    )(x, weight, bias2d)

    # Drop padded rows.
    return out[:B]


if __name__ == "__main__":
    key = jax.random.PRNGKey(0)
    kx, kw, kb = jax.random.split(key, 3)

    # Small shapes consistent with nn.Linear(10, 2).
    batch = 8
    x = jax.random.normal(kx, (batch, INPUT_SIZE), dtype=jnp.float32)
    weight = jax.random.normal(kw, (NUM_CLASSES, INPUT_SIZE), dtype=jnp.float32) * 0.1
    bias = jax.random.normal(kb, (NUM_CLASSES,), dtype=jnp.float32) * 0.1

    y = logistic_regression_forward(x, weight, bias)
    jax.block_until_ready(y)
    y_ref = x @ weight.T + bias
    assert jnp.allclose(y, y_ref, atol=1e-5), "mismatch vs reference (batch=8)"

    # Exercise the batch grid + tail padding path (grid > 1, B not a multiple of the tile).
    kx2 = jax.random.fold_in(kx, 1)
    batch2 = 300
    x2 = jax.random.normal(kx2, (batch2, INPUT_SIZE), dtype=jnp.float32)
    y2 = logistic_regression_forward(x2, weight, bias, tile_b=64)
    jax.block_until_ready(y2)
    y2_ref = x2 @ weight.T + bias
    assert jnp.allclose(y2, y2_ref, atol=1e-5), "mismatch vs reference (batch=300, tiled)"

    print("KERNEL_OK")
</pallas_src>

<mosaic_0001>
module attributes {stable_mosaic.version = 11 : i64} {
  func.func @linear_kernel(%arg0: i32, %arg1: memref<8x10xf32, #tpu.memory_space<vmem>>, %arg2: memref<2x10xf32, #tpu.memory_space<vmem>>, %arg3: memref<1x2xf32, #tpu.memory_space<vmem>>, %arg4: memref<8x2xf32, #tpu.memory_space<vmem>>) attributes {dimension_semantics = [#tpu.dimension_semantics<parallel>], iteration_bounds = array<i64: 1>, scalar_prefetch = 0 : i64, scratch_operands = 0 : i64, tpu.core_type = #tpu.core_type<tc>, window_params = [{transform_indices = @transform_0, window_bounds = array<i64: 8, 10>}, {pipeline_mode = #tpu.pipeline_mode<synchronous>, transform_indices = @transform_1, window_bounds = array<i64: 2, 10>}, {pipeline_mode = #tpu.pipeline_mode<synchronous>, transform_indices = @transform_2, window_bounds = array<i64: 1, 2>}, {transform_indices = @transform_3, window_bounds = array<i64: 8, 2>}]} {
    %c0 = arith.constant 0 : index
    %c0_0 = arith.constant 0 : index
    %0 = vector.load %arg1[%c0, %c0_0] : memref<8x10xf32, #tpu.memory_space<vmem>>, vector<8x10xf32>
    %c0_1 = arith.constant 0 : index
    %c0_2 = arith.constant 0 : index
    %1 = vector.load %arg2[%c0_1, %c0_2] : memref<2x10xf32, #tpu.memory_space<vmem>>, vector<2x10xf32>
    %c0_3 = arith.constant 0 : index
    %c0_4 = arith.constant 0 : index
    %2 = vector.load %arg3[%c0_3, %c0_4] : memref<1x2xf32, #tpu.memory_space<vmem>>, vector<1x2xf32>
    %cst = arith.constant dense<0.000000e+00> : vector<8x2xf32>
    %3 = tpu.matmul %0, %1, %cst {dimension_numbers = #tpu.dot_dimension_numbers<[1], [1], [0], [0], [0, 0, 1, 0], [], []>} : vector<8x10xf32>, vector<2x10xf32>, vector<8x2xf32> -> vector<8x2xf32>
    %4 = vector.broadcast %2 : vector<1x2xf32> to vector<8x2xf32>
    %5 = arith.addf %3, %4 : vector<8x2xf32>
    %c0_5 = arith.constant 0 : index
    %c0_6 = arith.constant 0 : index
    %6 = vector.load %arg4[%c0_5, %c0_6] : memref<8x2xf32, #tpu.memory_space<vmem>>, vector<8x2xf32>
    tpu.vector_store %arg4[%c0_5, %c0_6], %5 {strides = array<i32>} : memref<8x2xf32, #tpu.memory_space<vmem>>, vector<8x2xf32>,
    return
  }
  func.func @transform_0(%arg0: i32) -> (i32, i32) {
    %c0_i32 = arith.constant 0 : i32
    %c0_i32_0 = arith.constant 0 : i32
    return %arg0, %c0_i32 : i32, i32
  }
  func.func @transform_1(%arg0: i32) -> (i32, i32) {
    %c0_i32 = arith.constant 0 : i32
    %c0_i32_0 = arith.constant 0 : i32
    %c0_i32_1 = arith.constant 0 : i32
    return %c0_i32, %c0_i32_0 : i32, i32
  }
  func.func @transform_2(%arg0: i32) -> (i32, i32) {
    %c0_i32 = arith.constant 0 : i32
    %c0_i32_0 = arith.constant 0 : i32
    %c0_i32_1 = arith.constant 0 : i32
    return %c0_i32, %c0_i32_0 : i32, i32
  }
  func.func @transform_3(%arg0: i32) -> (i32, i32) {
    %c0_i32 = arith.constant 0 : i32
    %c0_i32_0 = arith.constant 0 : i32
    return %arg0, %c0_i32 : i32, i32
  }
}

</mosaic_0001>

<llo_original>
// kernel: logistic_regression_forward.1
$region0: #{logistic_regression_forward.1}
  #allocation0 [shape = 'u32[]', space=smem, size = 0x4, offset = 0x4, fixed_abs, tag = 'smem constant byte address 0x4 - core index']
  #allocation1 [shape = 'u32[144,128]{1,0:T(1,128)}', space=vmem, size = 0x12000, scoped, tag = 'internal scratch']
  %s0 = inlined_call_operand.hbm [shape: f32[8,10], index: 0, kind: input, shape index: {}]
  %s1 = inlined_call_operand.vmem [shape: f32[2,10], index: 1, kind: input, shape index: {}]
  %s2 = inlined_call_operand.vmem [shape: f32[1,2], index: 2, kind: input, shape index: {}]
  %s3 = inlined_call_operand.vmem [shape: f32[8,2], index: 3, kind: output, shape index: {}]
  %s4 = sld [smem:[#allocation0]]
  $region26: #{logistic_regression_forward.1} parent=0
    _
  %s6 = ssub.s32 1, %s4
  %s7 = scalar_select 0, %s6, %s4
  $region1: #{logistic_regression_forward.1} parent=0
    #allocation2 [shape = 'u8[4096]{0}', space=vmem, size = 0x1000, scoped, tag = 'input window, operand 0, single buffered']
    #allocation3 [shape = 's32[1]{0}', space=sflag, size = 0x4, scoped, tag = 'scoped memory for logistic_regression_forward.1']
    %8 = vsyncpa [#allocation3], 0
    // Predicated region
    $region2: #{logistic_regression_forward.1} parent=1 // pred_check
      _
    $region3: #{logistic_regression_forward.1} parent=1 // pred_check_branch
      %10 = sbr.rel (0) target = $region5
    $region4: #{logistic_regression_forward.1} parent=1 // pred_region
      %s12 = ssub.s32 128, 128
      %13 = vsyncadd [#allocation3], %s12
      %s15 = sshll.u32 [#allocation2], 4
      %s16 = int_to_ptr.vmem [resolvable:$true] %s15
      %18 = dma.hbm_to_vmem [thread:$0]  %s0, 128, %s16, [#allocation3]
    $region5: #{logistic_regression_forward.1} parent=1 // pred_fallthru
      _
    // Predicated region
    $region6: #{logistic_regression_forward.1} parent=1 // pred_check
      _
    $region7: #{logistic_regression_forward.1} parent=1 // pred_check_branch
      %20 = sbr.rel (0) target = $region9
    $region8: #{logistic_regression_forward.1} parent=1 // pred_region
      _
    $region9: #{logistic_regression_forward.1} parent=1 // pred_fallthru
      _
    // Predicated region
    $region10: #{logistic_regression_forward.1} parent=1 // pred_check
      _
    $region11: #{logistic_regression_forward.1} parent=1 // pred_check_branch
      %22 = sbr.rel (0) target = $region13
    $region12: #{logistic_regression_forward.1} parent=1 // pred_region
      _
    $region13: #{logistic_regression_forward.1} parent=1 // pred_fallthru
      _
    // Predicated region
    $region14: #{logistic_regression_forward.1} parent=1 // pred_check
      _
    $region15: #{logistic_regression_forward.1} parent=1 // pred_check_branch
      %24 = sbr.rel (0) target = $region17
    $region16: #{logistic_regression_forward.1} parent=1 // pred_region
      %25 = dma.done [#allocation3], 128
    $region17: #{logistic_regression_forward.1} parent=1 // pred_fallthru
      _
    %v26 = vld [vmem:[#allocation2] sm:$0xff]
    %v27 = vld [vmem:[%s1] sm:$0x3]
    %v28 = vld [vmem:[%s2] sm:$0x1]
    %v30 = vlaneseq
    %v31 = vshrl.u32 %v30, 7
    %v32 = vsub.s32 0, %v31
    %v33 = vrot.slane %v28, %v32
    %vm35 = vcmask 80896
    %v37 = vsel %vm35, %v26, 0
    %v40 = vsel %vm35, %v27, 0
    %42 = vmatprep.subr.mxu0 0.0
    %43 = vmatpush1.xpose.msra.mxu0 0.0
    %44 = vmatprep.subr.mxu0 0.0
    %45 = vmatpush1.xpose.msra.mxu0 0.0
    %46 = vmatprep.subr.mxu0 0.0
    %47 = vmatpush1.xpose.msra.mxu0 0.0
    %48 = vmatprep.subr.mxu0 0.0
    %49 = vmatpush1.xpose.msra.mxu0 0.0
    %50 = vmatprep.subr.mxu0 0.0
    %51 = vmatpush1.xpose.msra.mxu0 0.0
    %52 = vmatprep.subr.mxu0 0.0
    %53 = vmatpush1.xpose.msra.mxu0 0.0
    %54 = vmatprep.subr.mxu0 0.0
    %55 = vmatpush1.xpose.msra.mxu0 0.0
    %56 = vmatprep.subr.mxu0 0.0
    %57 = vmatpush1.xpose.msra.mxu0 0.0
    %58 = vmatprep.subr.mxu0 0.0
    %59 = vmatpush1.xpose.msra.mxu0 0.0
    %60 = vmatprep.subr.mxu0 0.0
    %61 = vmatpush1.xpose.msra.mxu0 0.0
    %62 = vmatprep.subr.mxu0 0.0
    %63 = vmatpush1.xpose.msra.mxu0 0.0
    %64 = vmatprep.subr.mxu0 0.0
    %65 = vmatpush1.xpose.msra.mxu0 0.0
    %66 = vmatprep.subr.mxu0 0.0
    %67 = vmatpush1.xpose.msra.mxu0 0.0
    %68 = vmatprep.subr.mxu0 0.0
    %69 = vmatpush1.xpose.msra.mxu0 0.0
    %70 = vmatprep.subr.mxu0 0.0
    %71 = vmatpush1.xpose.msra.mxu0 0.0
    %72 = vmatprep.subr.mxu0 0.0
    %73 = vmatpush1.xpose.msra.mxu0 %v40
    %74 = vmatprep.subr.mxu0 0.0
    %75 = vmatpush2.xpose.msra.mxu0 0.0
    %76 = vmatprep.subr.mxu0 0.0
    %77 = vmatpush2.xpose.msra.mxu0 0.0
    %78 = vmatprep.subr.mxu0 0.0
    %79 = vmatpush2.xpose.msra.mxu0 0.0
    %80 = vmatprep.subr.mxu0 0.0
    %81 = vmatpush2.xpose.msra.mxu0 0.0
    %82 = vmatprep.subr.mxu0 0.0
    %83 = vmatpush2.xpose.msra.mxu0 0.0
    %84 = vmatprep.subr.mxu0 0.0
    %85 = vmatpush2.xpose.msra.mxu0 0.0
    %86 = vmatprep.subr.mxu0 0.0
    %87 = vmatpush2.xpose.msra.mxu0 0.0
    %88 = vmatprep.subr.mxu0 0.0
    %89 = vmatpush2.xpose.msra.mxu0 0.0
    %90 = vmatprep.subr.mxu0 0.0
    %91 = vmatpush2.xpose.msra.mxu0 0.0
    %92 = vmatprep.subr.mxu0 0.0
    %93 = vmatpush2.xpose.msra.mxu0 0.0
    %94 = vmatprep.subr.mxu0 0.0
    %95 = vmatpush2.xpose.msra.mxu0 0.0
    %96 = vmatprep.subr.mxu0 0.0
    %97 = vmatpush2.xpose.msra.mxu0 0.0
    %98 = vmatprep.subr.mxu0 0.0
    %99 = vmatpush2.xpose.msra.mxu0 0.0
    %100 = vmatprep.subr.mxu0 0.0
    %101 = vmatpush2.xpose.msra.mxu0 0.0
    %102 = vmatprep.subr.mxu0 0.0
    %103 = vmatpush2.xpose.msra.mxu0 0.0
    %104 = vmatprep.subr.mxu0 0.0
    %105 = vmatpush2.xpose.msra.mxu0 0.0
    %106 = vmatprep.mubr.f32.mxu0 0.0
    %107 = vmatmul.mubr.f32.gmra.mxu0 %v37
    %v108 = vpop.f32.mrf.mxu0
    %v109 = vadd.f32 %v33, %v108
    %v110 = vpop.f32.mrf.mxu0
    %111 = vdwg.mxu0
    %vm112 = vcmask 15360
    %113 = vst.msk [vmem:[%s3] sm:$0xff] %vm112, %v109
    // Predicated region
    $region18: #{logistic_regression_forward.1} parent=1 // pred_check
      _
    $region19: #{logistic_regression_forward.1} parent=1 // pred_check_branch
      %115 = sbr.rel (0) target = $region21
    $region20: #{logistic_regression_forward.1} parent=1 // pred_region
      _
    $region21: #{logistic_regression_forward.1} parent=1 // pred_fallthru
      _
    // Predicated region
    $region22: #{logistic_regression_forward.1} parent=1 // pred_check
      _
    $region23: #{logistic_regression_forward.1} parent=1 // pred_check_branch
      %117 = sbr.rel (0) target = $region25
    $region24: #{logistic_regression_forward.1} parent=1 // pred_region
      _
    $region25: #{logistic_regression_forward.1} parent=1 // pred_fallthru
      _
    %118 = vsyncpa [#allocation3], 1

</llo_original>
